<compile_context>
chip_gen: v7x
topology: tpu7x:2x2x1
jax: 0.10.0
libtpu: 0.0.40
codegen_flags: <defaults>
</compile_context>

<pallas_src>
import functools

import jax
import jax.numpy as jnp
from jax.experimental import pallas as pl
from jax.experimental.pallas import tpu as pltpu


def _se_kernel(x_ref, w1t_ref, w2t_ref, o_ref, *, inv_hw):
    # x_ref  : (bn, C, HW)  block of a few batch elements, native dtype.
    #          C on sublanes, HW on lanes (native NCHW layout, no transpose).
    # w1t_ref: (C,  C_r)    fc1 weight, pre-transposed in the wrapper.
    # w2t_ref: (C_r, C)     fc2 weight, pre-transposed in the wrapper.
    x = x_ref[...]                                           # native dtype

    # Global average pool (AdaptiveAvgPool2d(1)): reduce over the lane (HW)
    # axis, accumulating in f32 without a full f32 shadow of the block.
    pooled = jnp.sum(x, axis=2, dtype=jnp.float32) * inv_hw  # (bn, C)

    # fc1 (1x1 conv, no bias) + ReLU, batched over the bn rows.
    hidden = jnp.maximum(
        jnp.dot(pooled, w1t_ref[...], preferred_element_type=jnp.float32), 0.0)

    # fc2 (1x1 conv, no bias) + Sigmoid.
    scale = jax.nn.sigmoid(
        jnp.dot(hidden, w2t_ref[...], preferred_element_type=jnp.float32))

    # Channel gate: broadcast along lanes; multiply + store in native dtype.
    o_ref[...] = (x * scale[:, :, None].astype(x.dtype)).astype(o_ref.dtype)


def _choose_batch_tile(N, HW, C, itemsize, *,
                       block_bytes_cap=2 << 20, min_steps=8):
    """Pick bn (a divisor of N) so blocks stay ~1-2 MiB and steps >= ~8/even."""
    per_elem = max(1, HW * C * itemsize)
    divisors = [d for d in range(1, N + 1) if N % d == 0]
    target_steps = min(N, min_steps)

    # TODO(synk): if a single batch element already exceeds the block cap
    # (huge C*HW), fall back to a two-pass structure (pool/scale kernel +
    # elementwise gate kernel tiled over (N, HW)) instead of one big block.
    fits = [d for d in divisors if d * per_elem <= block_bytes_cap] or [1]
    enough = [d for d in fits if N // d >= target_steps] or fits
    if N % 2 == 0:
        even = [d for d in enough if (N // d) % 2 == 0]
        if even:
            enough = even
    return max(enough)


def _vmem_capacity_bytes(default=64 << 20):
    try:
        info = pltpu.get_tpu_info()
        return int(getattr(info, "vmem_capacity_bytes", default))
    except Exception:
        return default


def se_module_res(x_nchw, w1, w2, *, block_bytes_cap=2 << 20):
    """SE residual gate.  x_nchw: (N, C, H, W); w1: (C_r, C); w2: (C, C_r).

    Conv2d(kernel_size=1, bias=False) weights are passed squeezed to 2-D.
    Returns (N, C, H, W) in the dtype of x.
    """
    N, C, H, W = x_nchw.shape
    HW = H * W
    C_r = w1.shape[0]
    itemsize = x_nchw.dtype.itemsize

    # Contiguous reshape only -- NO transpose.  NCHW stays as-is: C on
    # sublanes, HW on lanes inside the kernel.
    # NOTE: if HW is not a multiple of 128 the stores become masked vst.msk;
    # that is still far cheaper than materialising transposes in HBM.
    x = x_nchw.reshape(N, C, HW)

    # Pre-transpose the 1x1-conv weights so the kernel issues plain dots.
    w1t = jnp.asarray(w1).T                                   # (C, C_r)
    w2t = jnp.asarray(w2).T                                   # (C_r, C)

    bn = _choose_batch_tile(N, HW, C, itemsize, block_bytes_cap=block_bytes_cap)
    n_steps = N // bn                                         # exact, no pad

    # VMEM audit: double-buffered in + out blocks, double-buffered weight
    # tiles, plus a possible f32 upcast temp for sub-f32 inputs.
    block_bytes = bn * C * HW * itemsize
    f32_temp_bytes = bn * C * HW * 4 if itemsize < 4 else 0
    weight_bytes = (w1t.size * w1t.dtype.itemsize
                    + w2t.size * w2t.dtype.itemsize)
    need = 4 * block_bytes + 4 * weight_bytes + f32_temp_bytes
    vmem_cap = _vmem_capacity_bytes()
    vmem_limit = int(min(max(int(need * 1.5), 32 << 20),
                         48 << 20, int(vmem_cap * 0.75)))

    kernel = functools.partial(_se_kernel, inv_hw=1.0 / HW)

    out = pl.pallas_call(
        kernel,
        out_shape=jax.ShapeDtypeStruct((N, HW and N * 0 + HW and HW, C) if False
                                       else (N, C, HW), x.dtype),
        grid_spec=pltpu.PrefetchScalarGridSpec(
            num_scalar_prefetch=0,
            grid=(n_steps,),
            in_specs=[
                # NOTE: if a profile shows exposed input DMA, add
                # pipeline_mode=pl.Buffered(3) here AND bump the `need`
                # factor from 4 to the matching buffer count.
                pl.BlockSpec((bn, C, HW), lambda i: (i, 0, 0)),
                pl.BlockSpec((C, C_r), lambda i: (0, 0)),
                pl.BlockSpec((C_r, C), lambda i: (0, 0)),
            ],
            out_specs=pl.BlockSpec((bn, C, HW), lambda i: (i, 0, 0)),
        ),
        compiler_params=pltpu.CompilerParams(
            dimension_semantics=("parallel",),
            vmem_limit_bytes=vmem_limit),
    )(x, w1t, w2t)

    return out.reshape(N, C, H, W)


def _reference(x_nchw, w1, w2):
    # Pure-JAX reference mirroring the PyTorch SEModule_Res forward.
    pooled = jnp.mean(x_nchw.astype(jnp.float32), axis=(2, 3))       # (N, C)
    hidden = jnp.maximum(pooled @ w1.T, 0.0)                         # (N, C_r)
    scale = jax.nn.sigmoid(hidden @ w2.T)                            # (N, C)
    return (x_nchw * scale[:, :, None, None].astype(x_nchw.dtype)
            ).astype(x_nchw.dtype)


if __name__ == "__main__":
    N, C, H, W = 2, 16, 16, 16
    reduction = 4
    C_r = C // reduction

    key = jax.random.PRNGKey(0)
    kx, k1, k2 = jax.random.split(key, 3)

    x = jax.random.normal(kx, (N, C, H, W), dtype=jnp.float32)
    # Conv2d(kernel_size=1, bias=False) weights, squeezed -> (C_out, C_in).
    w1 = jax.random.normal(k1, (C_r, C), dtype=jnp.float32) * (1.0 / C) ** 0.5
    w2 = jax.random.normal(k2, (C, C_r), dtype=jnp.float32) * (1.0 / C_r) ** 0.5

    out = se_module_res(x, w1, w2)
    out = jax.block_until_ready(out)

    ref = _reference(x, w1, w2)
    assert out.shape == (N, C, H, W)
    assert out.dtype == x.dtype
    assert jnp.allclose(out, ref, atol=1e-5, rtol=1e-5), "mismatch vs reference"

    print("KERNEL_OK")
</pallas_src>

<mosaic_0001>
module attributes {stable_mosaic.version = 11 : i64} {
  func.func @_se_kernel(%arg0: i32, %arg1: memref<1x16x256xf32, #tpu.memory_space<vmem>>, %arg2: memref<16x4xf32, #tpu.memory_space<vmem>>, %arg3: memref<4x16xf32, #tpu.memory_space<vmem>>, %arg4: memref<1x16x256xf32, #tpu.memory_space<vmem>>) attributes {dimension_semantics = [#tpu.dimension_semantics<parallel>], iteration_bounds = array<i64: 2>, scalar_prefetch = 0 : i64, scratch_operands = 0 : i64, tpu.core_type = #tpu.core_type<tc>, window_params = [{transform_indices = @transform_0, window_bounds = array<i64: 1, 16, 256>}, {pipeline_mode = #tpu.pipeline_mode<synchronous>, transform_indices = @transform_1, window_bounds = array<i64: 16, 4>}, {pipeline_mode = #tpu.pipeline_mode<synchronous>, transform_indices = @transform_2, window_bounds = array<i64: 4, 16>}, {transform_indices = @transform_3, window_bounds = array<i64: 1, 16, 256>}]} {
    %c0 = arith.constant 0 : index
    %c0_0 = arith.constant 0 : index
    %c0_1 = arith.constant 0 : index
    %0 = vector.load %arg1[%c0, %c0_0, %c0_1] : memref<1x16x256xf32, #tpu.memory_space<vmem>>, vector<1x16x256xf32>
    %cst = arith.constant dense<0.000000e+00> : vector<1x16xf32>
    %1 = vector.multi_reduction <add>, %0, %cst [2] : vector<1x16x256xf32> to vector<1x16xf32>
    %cst_2 = arith.constant 3.906250e-03 : f32
    %2 = vector.broadcast %cst_2 : f32 to vector<1x16xf32>
    %3 = arith.mulf %1, %2 : vector<1x16xf32>
    %c0_3 = arith.constant 0 : index
    %c0_4 = arith.constant 0 : index
    %4 = vector.load %arg2[%c0_3, %c0_4] : memref<16x4xf32, #tpu.memory_space<vmem>>, vector<16x4xf32>
    %cst_5 = arith.constant dense<0.000000e+00> : vector<1x4xf32>
    %5 = tpu.matmul %3, %4, %cst_5 {dimension_numbers = #tpu.dot_dimension_numbers<[1], [0], [0], [1], [0, 0, 1, 1], [], []>} : vector<1x16xf32>, vector<16x4xf32>, vector<1x4xf32> -> vector<1x4xf32>
    %cst_6 = arith.constant 0.000000e+00 : f32
    %6 = vector.broadcast %cst_6 : f32 to vector<1x4xf32>
    %7 = arith.maximumf %5, %6 : vector<1x4xf32>
    %c0_7 = arith.constant 0 : index
    %c0_8 = arith.constant 0 : index
    %8 = vector.load %arg3[%c0_7, %c0_8] : memref<4x16xf32, #tpu.memory_space<vmem>>, vector<4x16xf32>
    %cst_9 = arith.constant dense<0.000000e+00> : vector<1x16xf32>
    %9 = tpu.matmul %7, %8, %cst_9 {dimension_numbers = #tpu.dot_dimension_numbers<[1], [0], [0], [1], [0, 0, 1, 1], [], []>} : vector<1x4xf32>, vector<4x16xf32>, vector<1x16xf32> -> vector<1x16xf32>
    %10 = arith.negf %9 : vector<1x16xf32>
    %11 = math.exp %10 : vector<1x16xf32>
    %cst_10 = arith.constant 1.000000e+00 : f32
    %12 = vector.broadcast %cst_10 : f32 to vector<1x16xf32>
    %13 = arith.addf %12, %11 : vector<1x16xf32>
    %14 = arith.divf %12, %13 : vector<1x16xf32>
    %15 = vector.shape_cast %14 : vector<1x16xf32> to vector<1x16x1xf32>
    %16 = vector.broadcast %15 : vector<1x16x1xf32> to vector<1x16x256xf32>
    %17 = arith.mulf %0, %16 : vector<1x16x256xf32>
    %c0_11 = arith.constant 0 : index
    %c0_12 = arith.constant 0 : index
    %c0_13 = arith.constant 0 : index
    %18 = vector.load %arg4[%c0_11, %c0_12, %c0_13] : memref<1x16x256xf32, #tpu.memory_space<vmem>>, vector<1x16x256xf32>
    tpu.vector_store %arg4[%c0_11, %c0_12, %c0_13], %17 {strides = array<i32>} : memref<1x16x256xf32, #tpu.memory_space<vmem>>, vector<1x16x256xf32>,
    return
  }
  func.func @transform_0(%arg0: i32) -> (i32, i32, i32) {
    %c0_i32 = arith.constant 0 : i32
    %c0_i32_0 = arith.constant 0 : i32
    %c0_i32_1 = arith.constant 0 : i32
    return %arg0, %c0_i32, %c0_i32_0 : i32, i32, i32
  }
  func.func @transform_1(%arg0: i32) -> (i32, i32) {
    %c0_i32 = arith.constant 0 : i32
    %c0_i32_0 = arith.constant 0 : i32
    %c0_i32_1 = arith.constant 0 : i32
    return %c0_i32, %c0_i32_0 : i32, i32
  }
  func.func @transform_2(%arg0: i32) -> (i32, i32) {
    %c0_i32 = arith.constant 0 : i32
    %c0_i32_0 = arith.constant 0 : i32
    %c0_i32_1 = arith.constant 0 : i32
    return %c0_i32, %c0_i32_0 : i32, i32
  }
  func.func @transform_3(%arg0: i32) -> (i32, i32, i32) {
    %c0_i32 = arith.constant 0 : i32
    %c0_i32_0 = arith.constant 0 : i32
    %c0_i32_1 = arith.constant 0 : i32
    return %arg0, %c0_i32, %c0_i32_0 : i32, i32, i32
  }
}

</mosaic_0001>

<llo_original>
// kernel: tpu_custom_call.1
$region0: #{tpu_custom_call.1}
  #allocation0 [shape = 'u32[]', space=smem, size = 0x4, offset = 0x4, fixed_abs, tag = 'smem constant byte address 0x4 - core index']
  #allocation1 [shape = 'u32[144,128]{1,0:T(1,128)}', space=vmem, size = 0x12000, scoped, tag = 'internal scratch']
  %s0 = inlined_call_operand.hbm [shape: f32[2,16,256], index: 0, kind: input, shape index: {}]
  %s1 = inlined_call_operand.vmem [shape: f32[16,4], index: 1, kind: input, shape index: {}]
  %s2 = inlined_call_operand.vmem [shape: f32[4,16], index: 2, kind: input, shape index: {}]
  %s3 = inlined_call_operand.hbm [shape: f32[2,16,256], index: 3, kind: output, shape index: {}]
  %s4 = sld [smem:[#allocation0]]
  $region49: #{tpu_custom_call.1} parent=0
    _
  %s6 = ssub.s32 1, %s4
  %s7 = scalar_select 0, %s6, %s4
  $region1: #{tpu_custom_call.1} parent=0
    #allocation2 [shape = 'u8[32768]{0}', space=vmem, size = 0x8000, scoped, tag = 'input window, operand 0']
    #allocation3 [shape = 's32[2]{0}', space=sflag, size = 0x8, scoped, tag = 'scoped memory for tpu_custom_call.1']
    #allocation4 [shape = 's32[2]{0}', space=sflag, size = 0x8, scoped, tag = 'scoped memory for tpu_custom_call.1']
    #allocation5 [shape = 'u8[32768]{0}', space=vmem, size = 0x8000, scoped, tag = 'output window, operand 0']
    %8 = vsyncpa [#allocation3], 0
    %s9 = scalar_lea.sflag [#allocation3], 1
    %10 = vsyncpa %s9, 0
    %11 = vsyncpa [#allocation4], 0
    %s12 = scalar_lea.sflag [#allocation4], 1
    %13 = vsyncpa %s12, 0
    loop: start=0, step=1, limit=4
    $region2: #{tpu_custom_call.1} parent=1 // loop_pre_header
      _
    $region3: #{tpu_custom_call.1} parent=1 // loop_header
      %s15 = sphi 0, %s19
      %p16 = scmp.ge.s32.totalorder %s15, 4
      %s25 = sphi 0, %s27
      %s28 = sphi 0, %s25
      %s29 = sphi 0, %s28
      %s45 = sphi 0, %s29
      %s49 = sphi 0, %s49
      %s51 = sphi 0, %s49
      %s52 = sphi 0, %s51
      %s66 = sphi 0, %s52
      %s70 = sphi 0, %s70
      %s72 = sphi 0, %s70
      %s73 = sphi 0, %s72
      %s87 = sphi 0, %s73
      %s93 = sphi 0, %s95
      %s96 = sphi 0, %s93
      %s97 = sphi 0, %s96
      %s113 = sphi 0, %s97
    $region4: #{tpu_custom_call.1} parent=1 // loop_header_branch
      %18 = sbr.rel (%p16) target = $region8
    $region5: #{tpu_custom_call.1} parent=1 // loop_body
      %s20 = ssub.s32 %s15, 1
      %s21 = ssub.s32 %s15, 2
      %s22 = sadd.s32 %s15, 1
      %s23 = ssub.s32 %s15, %s22
      %p24 = scmp.eq.s32.totalorder %s23, 0
      %s26 = sadd.s32 %s25, 1
      %s27 = scalar_select %p24, %s25, %s26
      %p30 = pneg %p24
      %p31 = scmp.eq.s32.totalorder %s15, 1
      %p32 = por %p30, %p31
      %p33 = scmp.ne.s32.totalorder %s25, %s28
      %p34 = scmp.eq.s32.totalorder %s15, 0
      %p35 = por %p33, %p34
      %p36 = scmp.ne.s32.totalorder %s25, %s28
      %p37 = scmp.eq.s32.totalorder %s20, 1
      %p38 = por %p36, %p37
      %p39 = scmp.ne.s32.totalorder %s28, %s29
      %p40 = scmp.eq.s32.totalorder %s20, 0
      %p41 = por %p39, %p40
      %p42 = scmp.ne.s32.totalorder %s28, %s29
      %p43 = scmp.eq.s32.totalorder %s21, 1
      %p44 = por %p42, %p43
      %p46 = scmp.ne.s32.totalorder %s29, %s45
      %p47 = scmp.eq.s32.totalorder %s21, 0
      %p48 = por %p46, %p47
      %s50 = sadd.s32 %s49, 1
      %p53 = scmp.eq.s32.totalorder %s15, 1
      %p54 = scmp.ne.s32.totalorder %s49, %s51
      %p55 = scmp.eq.s32.totalorder %s15, 0
      %p56 = por %p54, %p55
      %p57 = scmp.ne.s32.totalorder %s49, %s51
      %p58 = scmp.eq.s32.totalorder %s20, 1
      %p59 = por %p57, %p58
      %p60 = scmp.ne.s32.totalorder %s51, %s52
      %p61 = scmp.eq.s32.totalorder %s20, 0
      %p62 = por %p60, %p61
      %p63 = scmp.ne.s32.totalorder %s51, %s52
      %p64 = scmp.eq.s32.totalorder %s21, 1
      %p65 = por %p63, %p64
      %p67 = scmp.ne.s32.totalorder %s52, %s66
      %p68 = scmp.eq.s32.totalorder %s21, 0
      %p69 = por %p67, %p68
      %s71 = sadd.s32 %s70, 1
      %p74 = scmp.eq.s32.totalorder %s15, 1
      %p75 = scmp.ne.s32.totalorder %s70, %s72
      %p76 = scmp.eq.s32.totalorder %s15, 0
      %p77 = por %p75, %p76
      %p78 = scmp.ne.s32.totalorder %s70, %s72
      %p79 = scmp.eq.s32.totalorder %s20, 1
      %p80 = por %p78, %p79
      %p81 = scmp.ne.s32.totalorder %s72, %s73
      %p82 = scmp.eq.s32.totalorder %s20, 0
      %p83 = por %p81, %p82
      %p84 = scmp.ne.s32.totalorder %s72, %s73
      %p85 = scmp.eq.s32.totalorder %s21, 1
      %p86 = por %p84, %p85
      %p88 = scmp.ne.s32.totalorder %s73, %s87
      %p89 = scmp.eq.s32.totalorder %s21, 0
      %p90 = por %p88, %p89
      %s91 = ssub.s32 %s15, %s22
      %p92 = scmp.eq.s32.totalorder %s91, 0
      %s94 = sadd.s32 %s93, 1
      %s95 = scalar_select %p92, %s93, %s94
      %p98 = pneg %p92
      %p99 = scmp.eq.s32.totalorder %s15, 1
      %p100 = por %p98, %p99
      %p101 = scmp.ne.s32.totalorder %s93, %s96
      %p102 = scmp.eq.s32.totalorder %s15, 0
      %p103 = por %p101, %p102
      %p104 = scmp.ne.s32.totalorder %s93, %s96
      %p105 = scmp.eq.s32.totalorder %s20, 1
      %p106 = por %p104, %p105
      %p107 = scmp.ne.s32.totalorder %s96, %s97
      %p108 = scmp.eq.s32.totalorder %s20, 0
      %p109 = por %p107, %p108
      %p110 = scmp.ne.s32.totalorder %s96, %s97
      %p111 = scmp.eq.s32.totalorder %s21, 1
      %p112 = por %p110, %p111
      %p114 = scmp.ne.s32.totalorder %s97, %s113
      %p115 = scmp.eq.s32.totalorder %s21, 0
      %p116 = por %p114, %p115
      %p117 = scmp.le.s32.totalorder 1, %s15
      %p118 = scmp.lt.s32.totalorder %s15, 3
      %p119 = pnand %p117, %p118
      %p120 = pneg %p119
      // Predicated region
      $region9: #{tpu_custom_call.1} parent=5 // pred_check
        _
      $region10: #{tpu_custom_call.1} parent=5 // pred_check_branch
        %122 = sbr.rel (%p119) target = $region12
      $region11: #{tpu_custom_call.1} parent=5 // pred_region
        %s123 = ssub.s32 %s15, 1
        // Predicated region
        $region13: #{tpu_custom_call.1} parent=11 // pred_check
          %p124 = pneg %p62
        $region14: #{tpu_custom_call.1} parent=11 // pred_check_branch
          %126 = sbr.rel (%p124) target = $region16
        $region15: #{tpu_custom_call.1} parent=11 // pred_region
          _
        $region16: #{tpu_custom_call.1} parent=11 // pred_fallthru
          _
        // Predicated region
        $region17: #{tpu_custom_call.1} parent=11 // pred_check
          %p127 = pneg %p83
        $region18: #{tpu_custom_call.1} parent=11 // pred_check_branch
          %129 = sbr.rel (%p127) target = $region20
        $region19: #{tpu_custom_call.1} parent=11 // pred_region
          _
        $region20: #{tpu_custom_call.1} parent=11 // pred_fallthru
          _
      $region12: #{tpu_custom_call.1} parent=5 // pred_fallthru
        _
      %p130 = scmp.lt.s32.totalorder %s15, 2
      // Predicated region
      $region21: #{tpu_custom_call.1} parent=5 // pred_check
        %p131 = pneg %p130
      $region22: #{tpu_custom_call.1} parent=5 // pred_check_branch
        %133 = sbr.rel (%p131) target = $region24
      $region23: #{tpu_custom_call.1} parent=5 // pred_region
        // Predicated region
        $region25: #{tpu_custom_call.1} parent=23 // pred_check
          %p134 = pneg %p35
        $region26: #{tpu_custom_call.1} parent=23 // pred_check_branch
          %136 = sbr.rel (%p134) target = $region28
        $region27: #{tpu_custom_call.1} parent=23 // pred_region
          %s137 = sand.u32 %s25, 1
          %s138 = scalar_lea.sflag [#allocation3], %s137
          %s139 = sand.u32 %s25, 1
          %s140 = smul.addr %s139, 32
          %s141 = scalar_lea.vmem [#allocation2], %s140
          %s143 = ssub.s32 512, 512
          %144 = vsyncadd %s138, %s143
          %s145 = smul.addr %s15, 4
          %s146 = smul.addr %s145, 128
          %s147 = scalar_lea.hbm %s0, %s146
          %s148 = sshll.u32 %s141, 4
          %s149 = int_to_ptr.vmem [resolvable:$true] %s148
          %154 = dma.hbm_to_vmem [thread:$0]  %s147, 512, %s149, %s138, 256, 256, 16
        $region28: #{tpu_custom_call.1} parent=23 // pred_fallthru
          _
      $region24: #{tpu_custom_call.1} parent=5 // pred_fallthru
        _
      %p155 = scmp.le.s32.totalorder 1, %s15
      %p156 = scmp.lt.s32.totalorder %s15, 3
      %p157 = pnand %p155, %p156
      %p158 = pneg %p157
      // Predicated region
      $region29: #{tpu_custom_call.1} parent=5 // pred_check
        _
      $region30: #{tpu_custom_call.1} parent=5 // pred_check_branch
        %160 = sbr.rel (%p157) target = $region32
      $region31: #{tpu_custom_call.1} parent=5 // pred_region
        %s161 = ssub.s32 %s15, 1
        %s162 = sand.u32 %s28, 1
        %s163 = scalar_lea.sflag [#allocation3], %s162
        %s164 = sand.u32 %s28, 1
        %s165 = smul.addr %s164, 32
        %s166 = scalar_lea.vmem [#allocation2], %s165
        // Predicated region
        $region33: #{tpu_custom_call.1} parent=31 // pred_check
          %p167 = pneg %p41
        $region34: #{tpu_custom_call.1} parent=31 // pred_check_branch
          %169 = sbr.rel (%p167) target = $region36
        $region35: #{tpu_custom_call.1} parent=31 // pred_region
          %170 = dma.done %s163, 512
        $region36: #{tpu_custom_call.1} parent=31 // pred_fallthru
          _
        %s171 = sand.u32 %s28, 1
        %s172 = scalar_lea.sflag [#allocation3], %s171
        %s173 = sand.u32 %s28, 1
        %s174 = smul.addr %s173, 32
        %s175 = scalar_lea.vmem [#allocation2], %s174
        %p176 = pneg %p41
        %p177 = pneg %p38
        %p178 = pneg %p62
        %p179 = pneg %p59
        %p180 = pneg %p83
        %p181 = pneg %p80
        %p182 = pneg %p109
        %p183 = pneg %p106
        %s184 = sand.u32 %s96, 1
        %s185 = scalar_lea.sflag [#allocation4], %s184
        %s186 = sand.u32 %s96, 1
        %s187 = smul.addr %s186, 32
        %s188 = scalar_lea.vmem [#allocation5], %s187
        %v189 = vld [vmem:[%s166] sm:$0xff]
        %v190 = vld [vmem:[%s166 + $0x8] sm:$0xff]
        %v191 = vld [vmem:[%s166 + $0x10] sm:$0xff]
        %v192 = vld [vmem:[%s166 + $0x18] sm:$0xff]
        %v193 = vadd.f32 %v189, %v190
        %194 = vadd.xlane.f32.xlu0 %v193
        %v195 = vpop.xlane.xlu0 %194
        %v196 = vadd.f32 %v191, %v192
        %197 = vadd.xlane.f32.xlu0 %v196
        %v198 = vpop.xlane.xlu0 %197
        %v199 = vmul.f32 %v195, 0.00390625
        %v200 = vmul.f32 %v198, 0.00390625
        %v201 = vld [vmem:[%s1] sm:$0xff]
        %v202 = vld [vmem:[%s1 + $0x8] sm:$0xff]
        %v205 = vlaneseq
        %v206 = vand.u32 %v205, 127
        %v207 = vlaneseq
        %v208 = vshrl.u32 %v207, 7
        %v209 = vsub.s32 %v206, %v208
        %v210 = vrot.slane %v199, %v209
        %v211 = vadd.s32 %v206, 4294967288
        %v212 = vlaneseq
        %v213 = vshrl.u32 %v212, 7
        %v214 = vsub.s32 %v211, %v213
        %v215 = vrot.slane %v200, %v214
        %vm216 = vcmask 130112
        %v217 = vsel %vm216, %v215, %v210
        %vm218 = vcmask 130048
        %v219 = vsel %vm218, %v217, 0
        %221 = vmatprep.subr.mxu0 0.0
        %222 = vmatpush1.msra.mxu0 %v201
        %223 = vmatprep.subr.mxu0 0.0
        %224 = vmatpush1.msra.mxu0 %v202
        %225 = vmatprep.subr.mxu0 0.0
        %226 = vmatpush1.msra.mxu0 0.0
        %227 = vmatprep.subr.mxu0 0.0
        %228 = vmatpush1.msra.mxu0 0.0
        %229 = vmatprep.subr.mxu0 0.0
        %230 = vmatpush1.msra.mxu0 0.0
        %231 = vmatprep.subr.mxu0 0.0
        %232 = vmatpush1.msra.mxu0 0.0
        %233 = vmatprep.subr.mxu0 0.0
        %234 = vmatpush1.msra.mxu0 0.0
        %235 = vmatprep.subr.mxu0 0.0
        %236 = vmatpush1.msra.mxu0 0.0
        %237 = vmatprep.subr.mxu0 0.0
        %238 = vmatpush1.msra.mxu0 0.0
        %239 = vmatprep.subr.mxu0 0.0
        %240 = vmatpush1.msra.mxu0 0.0
        %241 = vmatprep.subr.mxu0 0.0
        %242 = vmatpush1.msra.mxu0 0.0
        %243 = vmatprep.subr.mxu0 0.0
        %244 = vmatpush1.msra.mxu0 0.0
        %245 = vmatprep.subr.mxu0 0.0
        %246 = vmatpush1.msra.mxu0 0.0
        %247 = vmatprep.subr.mxu0 0.0
        %248 = vmatpush1.msra.mxu0 0.0
        %249 = vmatprep.subr.mxu0 0.0
        %250 = vmatpush1.msra.mxu0 0.0
        %251 = vmatprep.subr.mxu0 0.0
        %252 = vmatpush1.msra.mxu0 0.0
        %253 = vmatprep.subr.mxu0 0.0
        %254 = vmatpush1.msra.mxu0 0.0
        %255 = vmatprep.subr.mxu0 0.0
        %256 = vmatpush1.msra.mxu0 0.0
        %257 = vmatprep.subr.mxu0 0.0
        %258 = vmatpush1.msra.mxu0 0.0
        %259 = vmatprep.subr.mxu0 0.0
        %260 = vmatpush1.msra.mxu0 0.0
        %261 = vmatprep.subr.mxu0 0.0
        %262 = vmatpush1.msra.mxu0 0.0
        %263 = vmatprep.subr.mxu0 0.0
        %264 = vmatpush1.msra.mxu0 0.0
        %265 = vmatprep.subr.mxu0 0.0
        %266 = vmatpush1.msra.mxu0 0.0
        %267 = vmatprep.subr.mxu0 0.0
        %268 = vmatpush1.msra.mxu0 0.0
        %269 = vmatprep.subr.mxu0 0.0
        %270 = vmatpush1.msra.mxu0 0.0
        %271 = vmatprep.subr.mxu0 0.0
        %272 = vmatpush1.msra.mxu0 0.0
        %273 = vmatprep.subr.mxu0 0.0
        %274 = vmatpush1.msra.mxu0 0.0
        %275 = vmatprep.subr.mxu0 0.0
        %276 = vmatpush1.msra.mxu0 0.0
        %277 = vmatprep.subr.mxu0 0.0
        %278 = vmatpush1.msra.mxu0 0.0
        %279 = vmatprep.subr.mxu0 0.0
        %280 = vmatpush1.msra.mxu0 0.0
        %281 = vmatprep.subr.mxu0 0.0
        %282 = vmatpush1.msra.mxu0 0.0
        %283 = vmatprep.subr.mxu0 0.0
        %284 = vmatpush1.msra.mxu0 0.0
        %285 = vmatprep.mubr.f32.mxu0 0.0
        %286 = vmatmul.mubr.f32.gmra.mrb[0].mxu0 %v219
        %v287 = vpop.f32.mrb[0].mxu0
        %v288 = vadd.f32 0.0, %v287
        %v289 = vpop.f32.mrb[0].mxu0
        %290 = vdwg.mxu0
        %v291 = vmax.f32 %v288, 0.0
        %v292 = vld [vmem:[%s2] sm:$0xf]
        %vm293 = vcmask 31744
        %v295 = vsel %vm293, %v291, 0
        %vm297 = vcmask 1043456
        %v299 = vsel %vm297, %v292, 0
        %301 = vmatprep.subr.mxu0 0.0
        %302 = vmatpush1.msra.mxu0 %v299
        %303 = vmatprep.subr.mxu0 0.0
        %304 = vmatpush1.msra.mxu0 0.0
        %305 = vmatprep.subr.mxu0 0.0
        %306 = vmatpush1.msra.mxu0 0.0
        %307 = vmatprep.subr.mxu0 0.0
        %308 = vmatpush1.msra.mxu0 0.0
        %309 = vmatprep.subr.mxu0 0.0
        %310 = vmatpush1.msra.mxu0 0.0
        %311 = vmatprep.subr.mxu0 0.0
        %312 = vmatpush1.msra.mxu0 0.0
        %313 = vmatprep.subr.mxu0 0.0
        %314 = vmatpush1.msra.mxu0 0.0
        %315 = vmatprep.subr.mxu0 0.0
        %316 = vmatpush1.msra.mxu0 0.0
        %317 = vmatprep.subr.mxu0 0.0
        %318 = vmatpush1.msra.mxu0 0.0
        %319 = vmatprep.subr.mxu0 0.0
        %320 = vmatpush1.msra.mxu0 0.0
        %321 = vmatprep.subr.mxu0 0.0
        %322 = vmatpush1.msra.mxu0 0.0
        %323 = vmatprep.subr.mxu0 0.0
        %324 = vmatpush1.msra.mxu0 0.0
        %325 = vmatprep.subr.mxu0 0.0
        %326 = vmatpush1.msra.mxu0 0.0
        %327 = vmatprep.subr.mxu0 0.0
        %328 = vmatpush1.msra.mxu0 0.0
        %329 = vmatprep.subr.mxu0 0.0
        %330 = vmatpush1.msra.mxu0 0.0
        %331 = vmatprep.subr.mxu0 0.0
        %332 = vmatpush1.msra.mxu0 0.0
        %333 = vmatprep.subr.mxu0 0.0
        %334 = vmatpush1.msra.mxu0 0.0
        %335 = vmatprep.subr.mxu0 0.0
        %336 = vmatpush1.msra.mxu0 0.0
        %337 = vmatprep.subr.mxu0 0.0
        %338 = vmatpush1.msra.mxu0 0.0
        %339 = vmatprep.subr.mxu0 0.0
        %340 = vmatpush1.msra.mxu0 0.0
        %341 = vmatprep.subr.mxu0 0.0
        %342 = vmatpush1.msra.mxu0 0.0
        %343 = vmatprep.subr.mxu0 0.0
        %344 = vmatpush1.msra.mxu0 0.0
        %345 = vmatprep.subr.mxu0 0.0
        %346 = vmatpush1.msra.mxu0 0.0
        %347 = vmatprep.subr.mxu0 0.0
        %348 = vmatpush1.msra.mxu0 0.0
        %349 = vmatprep.subr.mxu0 0.0
        %350 = vmatpush1.msra.mxu0 0.0
        %351 = vmatprep.subr.mxu0 0.0
        %352 = vmatpush1.msra.mxu0 0.0
        %353 = vmatprep.subr.mxu0 0.0
        %354 = vmatpush1.msra.mxu0 0.0
        %355 = vmatprep.subr.mxu0 0.0
        %356 = vmatpush1.msra.mxu0 0.0
        %357 = vmatprep.subr.mxu0 0.0
        %358 = vmatpush1.msra.mxu0 0.0
        %359 = vmatprep.subr.mxu0 0.0
        %360 = vmatpush1.msra.mxu0 0.0
        %361 = vmatprep.subr.mxu0 0.0
        %362 = vmatpush1.msra.mxu0 0.0
        %363 = vmatprep.subr.mxu0 0.0
        %364 = vmatpush1.msra.mxu0 0.0
        %365 = vmatprep.mubr.f32.mxu0 0.0
        %366 = vmatmul.mubr.f32.gmra.mrb[0].mxu0 %v295
        %v367 = vpop.f32.mrb[0].mxu0
        %v368 = vadd.f32 0.0, %v367
        %v369 = vpop.f32.mrb[0].mxu0
        %370 = vdwg.mxu0
        %v371 = vxor.u32 %v368, 2147483648
        %v372 = vmul.f32 %v371, 1.442695
        %v373 = vpow.pop %v372
        %v374 = vadd.f32 %v373, 1.0
        %v375 = vrcp.pop %v374
        %v376 = vmul.f32 1.0, %v375
        %v377 = vlaneseq
        %v378 = vshrl.u32 %v377, 7
        %v379 = vsub.s32 0, %v378
        %v380 = vrot.slane %v376, %v379
        %382 = vbcast.lane.b32.xlu0 %v380, 256
        %v383 = vpop.permute.xlu0 %382
        %s385 = sor.u32 256, 8
        %386 = vbcast.lane.b32.xlu0 %v380, %s385
        %v387 = vpop.permute.xlu0 %386
        %v388 = vmul.f32 %v189, %v383
        %v389 = vmul.f32 %v190, %v383
        %v390 = vmul.f32 %v191, %v387
        %v391 = vmul.f32 %v192, %v387
        %392 = vst [vmem:[%s188] sm:$0xff] %v388
        %393 = vst [vmem:[%s188 + $0x8] sm:$0xff] %v389
        %394 = vst [vmem:[%s188 + $0x10] sm:$0xff] %v390
        %395 = vst [vmem:[%s188 + $0x18] sm:$0xff] %v391
        %s396 = sand.u32 %s96, 1
        %s397 = scalar_lea.sflag [#allocation4], %s396
        %s398 = sand.u32 %s96, 1
        %s399 = smul.addr %s398, 32
        %s400 = scalar_lea.vmem [#allocation5], %s399
        // Predicated region
        $region37: #{tpu_custom_call.1} parent=31 // pred_check
          %p401 = pneg %p106
        $region38: #{tpu_custom_call.1} parent=31 // pred_check_branch
          %403 = sbr.rel (%p401) target = $region40
        $region39: #{tpu_custom_call.1} parent=31 // pred_region
          %s405 = ssub.s32 512, 512
          %406 = vsyncadd %s397, %s405
          %s407 = smul.addr %s20, 4
          %s408 = smul.addr %s407, 128
          %s409 = scalar_lea.hbm %s3, %s408
          %s410 = sshll.u32 %s400, 4
          %s411 = int_to_ptr.vmem [resolvable:$true] %s410
          %416 = dma.vmem_to_hbm [thread:$0]  %s411, 512, %s409, %s397, 256, 256, 16
        $region40: #{tpu_custom_call.1} parent=31 // pred_fallthru
          _
      $region32: #{tpu_custom_call.1} parent=5 // pred_fallthru
        _
      %p417 = scmp.le.s32.totalorder 2, %s15
      // Predicated region
      $region41: #{tpu_custom_call.1} parent=5 // pred_check
        %p418 = pneg %p417
      $region42: #{tpu_custom_call.1} parent=5 // pred_check_branch
        %420 = sbr.rel (%p418) target = $region44
      $region43: #{tpu_custom_call.1} parent=5 // pred_region
        %s421 = ssub.s32 %s15, 2
        // Predicated region
        $region45: #{tpu_custom_call.1} parent=43 // pred_check
          %p422 = pneg %p112
        $region46: #{tpu_custom_call.1} parent=43 // pred_check_branch
          %424 = sbr.rel (%p422) target = $region48
        $region47: #{tpu_custom_call.1} parent=43 // pred_region
          %s425 = sand.u32 %s97, 1
          %s426 = scalar_lea.sflag [#allocation4], %s425
          %s427 = sand.u32 %s97, 1
          %s428 = smul.addr %s427, 32
          %s429 = scalar_lea.vmem [#allocation5], %s428
          %430 = dma.done %s426, 512
        $region48: #{tpu_custom_call.1} parent=43 // pred_fallthru
          _
      $region44: #{tpu_custom_call.1} parent=5 // pred_fallthru
        _
    $region6: #{tpu_custom_call.1} parent=1 // loop_footer
      %s19 = sadd.s32 1, %s15
    $region7: #{tpu_custom_call.1} parent=1 // loop_footer_branch
      %14 = sbr.rel target = $region3
    $region8: #{tpu_custom_call.1} parent=1 // loop_exit
      _
    %431 = vsyncpa [#allocation3], 1
    %s432 = scalar_lea.sflag [#allocation3], 1
    %433 = vsyncpa %s432, 1
    %434 = vsyncpa [#allocation4], 1
    %s435 = scalar_lea.sflag [#allocation4], 1
    %436 = vsyncpa %s435, 1

</llo_original>
